<compile_context>
chip_gen: v6e
topology: v6e:2x2x1
jax: 0.10.0
libtpu: 0.0.40
codegen_flags: <defaults>
</compile_context>

<pallas_src>
import functools

import jax
import jax.numpy as jnp
from jax.experimental import pallas as pl
from jax.experimental.pallas import tpu as pltpu


def conbr_kernel(x_ref, w_ref, o_ref, xpad_ref, col_ref, *,
                 kernel_size, stride, dilation, padding):
    """One grid step = a block of B batch elements.

    x_ref:    [B, C_in, L]           unpadded input block (auto-pipelined)
    w_ref:    [C_out, K*C_in + 1]    BN-folded weight, last column = folded bias
    o_ref:    [B, C_out, L_out]      ReLU(BN(conv(x))) output block
    xpad_ref: [B, C_in, L + 2*pad]   VMEM halo scratch (zero edges)
    col_ref:  [K*C_in + 1, L_col]    VMEM im2col scratch (last row = ones)
    """
    B, C_in, L = x_ref.shape
    L_out = o_ref.shape[-1]
    L_col = col_ref.shape[-1]          # L_out for stride 1, else (L_out-1)*stride+1
    K = kernel_size

    # Refresh the zero halo and the ones (bias) row every step.  Cheap, and
    # robust under megacore splitting of the "parallel" grid axis (a
    # program_id==0-gated init would never run on the second TensorCore).
    if padding > 0:
        zeros_edge = jnp.zeros((B, C_in, padding), jnp.float32)
        xpad_ref[:, :, pl.ds(0, padding)] = zeros_edge
        xpad_ref[:, :, pl.ds(padding + L, padding)] = zeros_edge
    col_ref[pl.ds(K * C_in, 1), :] = jnp.ones((1, L_col), jnp.float32)

    # Stage this step's batch block into the interior of the halo scratch
    # (replaces the wrapper-side jnp.pad -> no extra HBM round trip).
    xpad_ref[:, :, pl.ds(padding, L)] = x_ref[...].astype(jnp.float32)

    w = w_ref[...]                      # (C_out, K*C_in + 1), BN + bias folded

    if stride > 1:
        # 0/1 selection matrix picking every `stride`-th stride-1 column.
        rows = jax.lax.broadcasted_iota(jnp.int32, (L_col, L_out), 0)
        cols = jax.lax.broadcasted_iota(jnp.int32, (L_col, L_out), 1)
        sel = (rows == stride * cols).astype(jnp.float32)

    for b in range(B):                  # static unroll, B is small
        # im2col: row k*C_in + c <- padded channel c shifted by tap-k offset.
        for k in range(K):
            col_ref[pl.ds(k * C_in, C_in), :] = xpad_ref[
                b, :, pl.ds(k * dilation, L_col)]
        # Single MXU matmul: [C_out, K*C_in+1] x [K*C_in+1, L_col], f32 acc.
        acc = jnp.dot(w, col_ref[...], preferred_element_type=jnp.float32)
        if stride > 1:
            acc = jnp.dot(acc, sel, preferred_element_type=jnp.float32)
        o_ref[b] = jnp.maximum(acc, 0.0).astype(o_ref.dtype)      # ReLU


def fold_conv_bn(w, b, gamma, beta, running_mean, running_var, eps=1e-5):
    """Fold inference-mode BatchNorm1d and the conv bias into one packed weight.

    w: [C_out, C_in, K] (PyTorch layout); b/gamma/beta/mean/var: [C_out].
    Returns w_packed: [C_out, K*C_in + 1] where column k*C_in + c is the
    BN-scaled tap-k weight of channel c and the last column is the folded bias.
    """
    scale = gamma * jax.lax.rsqrt(running_var + eps)                  # [C_out]
    w_eff = w * scale[:, None, None]                                  # [C_out, C_in, K]
    b_eff = (b - running_mean) * scale + beta                         # [C_out]
    C_out, C_in, K = w.shape
    w_flat = jnp.transpose(w_eff, (0, 2, 1)).reshape(C_out, K * C_in)  # (k, c) order
    return jnp.concatenate([w_flat, b_eff[:, None]], axis=1)          # [C_out, K*C_in+1]


def _pick_block_batch(n):
    """Batch elements per grid step: divide N evenly, keep >= 2 grid steps
    (v7x has 2 TensorCores), cap the per-step block at 8 elements."""
    for b in range(min(n, 8), 0, -1):
        if n % b == 0 and (n // b >= 2 or n == 1):
            return b
    return 1


@functools.partial(jax.jit, static_argnames=(
    "kernel_size", "stride", "dilation", "padding", "block_batch"))
def conbr_block_forward(x, w_packed, *, kernel_size, stride=1, dilation=1,
                        padding=3, block_batch=None):
    """x: [N, C_in, L]; w_packed: [C_out, K*C_in + 1] from fold_conv_bn."""
    N, C_in, L = x.shape
    C_out = w_packed.shape[0]
    assert w_packed.shape[1] == kernel_size * C_in + 1
    # PyTorch Conv1d output length.
    L_out = (L + 2 * padding - dilation * (kernel_size - 1) - 1) // stride + 1
    L_pad = L + 2 * padding
    L_col = L_out if stride == 1 else (L_out - 1) * stride + 1
    B = block_batch if block_batch is not None else _pick_block_batch(N)
    assert N % B == 0

    kernel = functools.partial(
        conbr_kernel, kernel_size=kernel_size, stride=stride,
        dilation=dilation, padding=padding)

    return pl.pallas_call(
        kernel,
        out_shape=jax.ShapeDtypeStruct((N, C_out, L_out), jnp.float32),
        grid=(N // B,),
        in_specs=[
            # Per-step block of B batch elements (auto double-buffered).
            pl.BlockSpec((B, C_in, L), lambda i: (i, 0, 0)),
            # Constant index_map -> packed weight stays resident across steps.
            pl.BlockSpec((C_out, kernel_size * C_in + 1), lambda i: (0, 0)),
        ],
        out_specs=pl.BlockSpec((B, C_out, L_out), lambda i: (i, 0, 0)),
        scratch_shapes=[
            pltpu.VMEM((B, C_in, L_pad), jnp.float32),                    # halo x
            pltpu.VMEM((kernel_size * C_in + 1, L_col), jnp.float32),     # im2col
        ],
        compiler_params=pltpu.CompilerParams(
            dimension_semantics=("parallel",)),
    )(x, w_packed)


def reference_forward(x, w, b, gamma, beta, mean, var, *,
                      stride, dilation, padding, eps=1e-5):
    """Unfused conv -> BN(eval) -> ReLU reference in plain JAX."""
    y = jax.lax.conv_general_dilated(
        x, w,
        window_strides=(stride,),
        padding=[(padding, padding)],
        rhs_dilation=(dilation,),
        dimension_numbers=("NCH", "OIH", "NCH"),
        precision=jax.lax.Precision.HIGHEST,
    )
    y = y + b[None, :, None]
    y = (y - mean[None, :, None]) * jax.lax.rsqrt(var[None, :, None] + eps)
    y = y * gamma[None, :, None] + beta[None, :, None]
    return jnp.maximum(y, 0.0)


if __name__ == "__main__":
    # Small shapes consistent with the module: in_layer=4, out_layer=8,
    # kernel_size=7, padding=3 (hardcoded in the module), L=128, batch=2.
    N, C_in, C_out, L = 2, 4, 8, 128
    K, padding = 7, 3

    key = jax.random.PRNGKey(0)
    kx, kw, kb, kg, kbt, km, kv = jax.random.split(key, 7)

    x = jax.random.normal(kx, (N, C_in, L), dtype=jnp.float32)

    # Conv1d params (PyTorch layout [C_out, C_in, K]).
    w = 0.2 * jax.random.normal(kw, (C_out, C_in, K), dtype=jnp.float32)
    b = 0.1 * jax.random.normal(kb, (C_out,), dtype=jnp.float32)

    # BatchNorm1d params / running stats (perturbed so they matter).
    gamma = 1.0 + 0.1 * jax.random.normal(kg, (C_out,), dtype=jnp.float32)
    beta = 0.1 * jax.random.normal(kbt, (C_out,), dtype=jnp.float32)
    running_mean = 0.1 * jax.random.normal(km, (C_out,), dtype=jnp.float32)
    running_var = jnp.abs(1.0 + 0.1 * jax.random.normal(kv, (C_out,),
                                                        dtype=jnp.float32))

    # Fold BN + bias into the packed conv weight once (parameter-setup time).
    w_packed = fold_conv_bn(w, b, gamma, beta, running_mean, running_var)

    # Exercise stride/dilation variants of the module constructor.
    for stride, dilation in [(1, 1), (1, 2), (2, 1)]:
        out = conbr_block_forward(x, w_packed, kernel_size=K,
                                  stride=stride, dilation=dilation,
                                  padding=padding)
        out = jax.block_until_ready(out)

        ref = reference_forward(x, w, b, gamma, beta, running_mean, running_var,
                                stride=stride, dilation=dilation, padding=padding)
        L_out = (L + 2 * padding - dilation * (K - 1) - 1) // stride + 1
        assert out.shape == ref.shape == (N, C_out, L_out), (out.shape, ref.shape)
        err = float(jnp.max(jnp.abs(out - ref)))
        assert jnp.allclose(out, ref, atol=1e-4, rtol=1e-4), (
            f"mismatch for stride={stride} dilation={dilation}: max_err={err}")

    print("KERNEL_OK")
</pallas_src>

<mosaic_0001>
module attributes {stable_mosaic.version = 11 : i64} {
  func.func @conbr_kernel(%arg0: i32, %arg1: memref<1x4x128xf32, #tpu.memory_space<vmem>>, %arg2: memref<8x29xf32, #tpu.memory_space<vmem>>, %arg3: memref<1x8x128xf32, #tpu.memory_space<vmem>>, %arg4: memref<1x4x134xf32, #tpu.memory_space<vmem>>, %arg5: memref<29x128xf32, #tpu.memory_space<vmem>>) attributes {dimension_semantics = [#tpu.dimension_semantics<parallel>], iteration_bounds = array<i64: 2>, scalar_prefetch = 0 : i64, scratch_operands = 2 : i64, tpu.core_type = #tpu.core_type<tc>, window_params = [{transform_indices = @transform_0, window_bounds = array<i64: 1, 4, 128>}, {pipeline_mode = #tpu.pipeline_mode<synchronous>, transform_indices = @transform_1, window_bounds = array<i64: 8, 29>}, {transform_indices = @transform_2, window_bounds = array<i64: 1, 8, 128>}]} {
    %cst = arith.constant 0.000000e+00 : f32
    %0 = vector.broadcast %cst : f32 to vector<1x4x3xf32>
    %c0 = arith.constant 0 : index
    %c0_0 = arith.constant 0 : index
    %c0_1 = arith.constant 0 : index
    %1 = vector.load %arg4[%c0, %c0_0, %c0_1] : memref<1x4x134xf32, #tpu.memory_space<vmem>>, vector<1x4x3xf32>
    tpu.vector_store %arg4[%c0, %c0_0, %c0_1], %0 {strides = array<i32>} : memref<1x4x134xf32, #tpu.memory_space<vmem>>, vector<1x4x3xf32>,
    %c0_2 = arith.constant 0 : index
    %c0_3 = arith.constant 0 : index
    %c131 = arith.constant 131 : index
    %2 = vector.load %arg4[%c0_2, %c0_3, %c131] : memref<1x4x134xf32, #tpu.memory_space<vmem>>, vector<1x4x3xf32>
    tpu.vector_store %arg4[%c0_2, %c0_3, %c131], %0 {strides = array<i32>} : memref<1x4x134xf32, #tpu.memory_space<vmem>>, vector<1x4x3xf32>,
    %cst_4 = arith.constant 1.000000e+00 : f32
    %3 = vector.broadcast %cst_4 : f32 to vector<1x128xf32>
    %c28 = arith.constant 28 : index
    %c0_5 = arith.constant 0 : index
    %4 = vector.load %arg5[%c28, %c0_5] : memref<29x128xf32, #tpu.memory_space<vmem>>, vector<1x128xf32>
    tpu.vector_store %arg5[%c28, %c0_5], %3 {strides = array<i32>} : memref<29x128xf32, #tpu.memory_space<vmem>>, vector<1x128xf32>,
    %c0_6 = arith.constant 0 : index
    %c0_7 = arith.constant 0 : index
    %c0_8 = arith.constant 0 : index
    %5 = vector.load %arg1[%c0_6, %c0_7, %c0_8] : memref<1x4x128xf32, #tpu.memory_space<vmem>>, vector<1x4x128xf32>
    %c0_9 = arith.constant 0 : index
    %c0_10 = arith.constant 0 : index
    %c3 = arith.constant 3 : index
    %6 = vector.load %arg4[%c0_9, %c0_10, %c3] : memref<1x4x134xf32, #tpu.memory_space<vmem>>, vector<1x4x128xf32>
    tpu.vector_store %arg4[%c0_9, %c0_10, %c3], %5 {strides = array<i32>} : memref<1x4x134xf32, #tpu.memory_space<vmem>>, vector<1x4x128xf32>,
    %c0_11 = arith.constant 0 : index
    %c0_12 = arith.constant 0 : index
    %7 = vector.load %arg2[%c0_11, %c0_12] : memref<8x29xf32, #tpu.memory_space<vmem>>, vector<8x29xf32>
    %c0_13 = arith.constant 0 : index
    %c0_14 = arith.constant 0 : index
    %c0_15 = arith.constant 0 : index
    %8 = vector.load %arg4[%c0_13, %c0_14, %c0_15] : memref<1x4x134xf32, #tpu.memory_space<vmem>>, vector<1x4x128xf32>
    %9 = vector.shape_cast %8 : vector<1x4x128xf32> to vector<4x128xf32>
    %c0_16 = arith.constant 0 : index
    %c0_17 = arith.constant 0 : index
    %10 = vector.load %arg5[%c0_16, %c0_17] : memref<29x128xf32, #tpu.memory_space<vmem>>, vector<4x128xf32>
    tpu.vector_store %arg5[%c0_16, %c0_17], %9 {strides = array<i32>} : memref<29x128xf32, #tpu.memory_space<vmem>>, vector<4x128xf32>,
    %c0_18 = arith.constant 0 : index
    %c0_19 = arith.constant 0 : index
    %c1 = arith.constant 1 : index
    %11 = vector.load %arg4[%c0_18, %c0_19, %c1] : memref<1x4x134xf32, #tpu.memory_space<vmem>>, vector<1x4x128xf32>
    %12 = vector.shape_cast %11 : vector<1x4x128xf32> to vector<4x128xf32>
    %c4 = arith.constant 4 : index
    %c0_20 = arith.constant 0 : index
    %13 = vector.load %arg5[%c4, %c0_20] : memref<29x128xf32, #tpu.memory_space<vmem>>, vector<4x128xf32>
    tpu.vector_store %arg5[%c4, %c0_20], %12 {strides = array<i32>} : memref<29x128xf32, #tpu.memory_space<vmem>>, vector<4x128xf32>,
    %c0_21 = arith.constant 0 : index
    %c0_22 = arith.constant 0 : index
    %c2 = arith.constant 2 : index
    %14 = vector.load %arg4[%c0_21, %c0_22, %c2] : memref<1x4x134xf32, #tpu.memory_space<vmem>>, vector<1x4x128xf32>
    %15 = vector.shape_cast %14 : vector<1x4x128xf32> to vector<4x128xf32>
    %c8 = arith.constant 8 : index
    %c0_23 = arith.constant 0 : index
    %16 = vector.load %arg5[%c8, %c0_23] : memref<29x128xf32, #tpu.memory_space<vmem>>, vector<4x128xf32>
    tpu.vector_store %arg5[%c8, %c0_23], %15 {strides = array<i32>} : memref<29x128xf32, #tpu.memory_space<vmem>>, vector<4x128xf32>,
    %c0_24 = arith.constant 0 : index
    %c0_25 = arith.constant 0 : index
    %c3_26 = arith.constant 3 : index
    %17 = vector.load %arg4[%c0_24, %c0_25, %c3_26] : memref<1x4x134xf32, #tpu.memory_space<vmem>>, vector<1x4x128xf32>
    %18 = vector.shape_cast %17 : vector<1x4x128xf32> to vector<4x128xf32>
    %c12 = arith.constant 12 : index
    %c0_27 = arith.constant 0 : index
    %19 = vector.load %arg5[%c12, %c0_27] : memref<29x128xf32, #tpu.memory_space<vmem>>, vector<4x128xf32>
    tpu.vector_store %arg5[%c12, %c0_27], %18 {strides = array<i32>} : memref<29x128xf32, #tpu.memory_space<vmem>>, vector<4x128xf32>,
    %c0_28 = arith.constant 0 : index
    %c0_29 = arith.constant 0 : index
    %c4_30 = arith.constant 4 : index
    %20 = vector.load %arg4[%c0_28, %c0_29, %c4_30] : memref<1x4x134xf32, #tpu.memory_space<vmem>>, vector<1x4x128xf32>
    %21 = vector.shape_cast %20 : vector<1x4x128xf32> to vector<4x128xf32>
    %c16 = arith.constant 16 : index
    %c0_31 = arith.constant 0 : index
    %22 = vector.load %arg5[%c16, %c0_31] : memref<29x128xf32, #tpu.memory_space<vmem>>, vector<4x128xf32>
    tpu.vector_store %arg5[%c16, %c0_31], %21 {strides = array<i32>} : memref<29x128xf32, #tpu.memory_space<vmem>>, vector<4x128xf32>,
    %c0_32 = arith.constant 0 : index
    %c0_33 = arith.constant 0 : index
    %c5 = arith.constant 5 : index
    %23 = vector.load %arg4[%c0_32, %c0_33, %c5] : memref<1x4x134xf32, #tpu.memory_space<vmem>>, vector<1x4x128xf32>
    %24 = vector.shape_cast %23 : vector<1x4x128xf32> to vector<4x128xf32>
    %c20 = arith.constant 20 : index
    %c0_34 = arith.constant 0 : index
    %25 = vector.load %arg5[%c20, %c0_34] : memref<29x128xf32, #tpu.memory_space<vmem>>, vector<4x128xf32>
    tpu.vector_store %arg5[%c20, %c0_34], %24 {strides = array<i32>} : memref<29x128xf32, #tpu.memory_space<vmem>>, vector<4x128xf32>,
    %c0_35 = arith.constant 0 : index
    %c0_36 = arith.constant 0 : index
    %c6 = arith.constant 6 : index
    %26 = vector.load %arg4[%c0_35, %c0_36, %c6] : memref<1x4x134xf32, #tpu.memory_space<vmem>>, vector<1x4x128xf32>
    %27 = vector.shape_cast %26 : vector<1x4x128xf32> to vector<4x128xf32>
    %c24 = arith.constant 24 : index
    %c0_37 = arith.constant 0 : index
    %28 = vector.load %arg5[%c24, %c0_37] : memref<29x128xf32, #tpu.memory_space<vmem>>, vector<4x128xf32>
    tpu.vector_store %arg5[%c24, %c0_37], %27 {strides = array<i32>} : memref<29x128xf32, #tpu.memory_space<vmem>>, vector<4x128xf32>,
    %c0_38 = arith.constant 0 : index
    %c0_39 = arith.constant 0 : index
    %29 = vector.load %arg5[%c0_38, %c0_39] : memref<29x128xf32, #tpu.memory_space<vmem>>, vector<29x128xf32>
    %cst_40 = arith.constant dense<0.000000e+00> : vector<8x128xf32>
    %30 = tpu.matmul %7, %29, %cst_40 {dimension_numbers = #tpu.dot_dimension_numbers<[1], [0], [0], [1], [0, 0, 1, 1], [], []>} : vector<8x29xf32>, vector<29x128xf32>, vector<8x128xf32> -> vector<8x128xf32>
    %cst_41 = arith.constant 0.000000e+00 : f32
    %31 = vector.broadcast %cst_41 : f32 to vector<8x128xf32>
    %32 = arith.maximumf %30, %31 : vector<8x128xf32>
    %c0_42 = arith.constant 0 : index
    %c0_43 = arith.constant 0 : index
    %c0_44 = arith.constant 0 : index
    %33 = vector.load %arg3[%c0_42, %c0_43, %c0_44] : memref<1x8x128xf32, #tpu.memory_space<vmem>>, vector<1x8x128xf32>
    %34 = vector.shape_cast %33 : vector<1x8x128xf32> to vector<8x128xf32>
    %35 = vector.shape_cast %32 : vector<8x128xf32> to vector<1x8x128xf32>
    tpu.vector_store %arg3[%c0_42, %c0_43, %c0_44], %35 {strides = array<i32>} : memref<1x8x128xf32, #tpu.memory_space<vmem>>, vector<1x8x128xf32>,
    return
  }
  func.func @transform_0(%arg0: i32) -> (i32, i32, i32) {
    %c0_i32 = arith.constant 0 : i32
    %c0_i32_0 = arith.constant 0 : i32
    %c0_i32_1 = arith.constant 0 : i32
    return %arg0, %c0_i32, %c0_i32_0 : i32, i32, i32
  }
  func.func @transform_1(%arg0: i32) -> (i32, i32) {
    %c0_i32 = arith.constant 0 : i32
    %c0_i32_0 = arith.constant 0 : i32
    %c0_i32_1 = arith.constant 0 : i32
    return %c0_i32, %c0_i32_0 : i32, i32
  }
  func.func @transform_2(%arg0: i32) -> (i32, i32, i32) {
    %c0_i32 = arith.constant 0 : i32
    %c0_i32_0 = arith.constant 0 : i32
    %c0_i32_1 = arith.constant 0 : i32
    return %arg0, %c0_i32, %c0_i32_0 : i32, i32, i32
  }
}

</mosaic_0001>

<llo_original>
// kernel: conbr_block_forward.1
$region0: #{conbr_block_forward.1}
  #allocation0 [shape = 'u32[]', space=smem, size = 0x4, offset = 0x4, fixed_abs, tag = 'smem constant byte address 0x4 - core index']
  #allocation1 [shape = 'u32[144,128]{1,0:T(1,128)}', space=vmem, size = 0x12000, scoped, tag = 'internal scratch']
  #allocation2 [shape = 'f32[1,4,134]{2,1,0:T(4,128)}', space=vmem, size = 0x1000, scoped, tag = 'scratch operand']
  #allocation3 [shape = 'f32[29,128]{1,0:T(8,128)}', space=vmem, size = 0x4000, scoped, tag = 'scratch operand']
  %s0 = inlined_call_operand.hbm [shape: f32[2,4,128], index: 0, kind: input, shape index: {}]
  %s1 = inlined_call_operand.hbm [shape: f32[8,29], index: 1, kind: input, shape index: {}]
  %s2 = inlined_call_operand.hbm [shape: f32[2,8,128], index: 2, kind: output, shape index: {}]
  %s3 = sld [smem:[#allocation0]]
  $region49: #{conbr_block_forward.1} parent=0
    _
  %s5 = ssub.s32 1, %s3
  %s6 = scalar_select 0, %s5, %s3
  $region1: #{conbr_block_forward.1} parent=0
    #allocation4 [shape = 'u8[4096]{0}', space=vmem, size = 0x1000, scoped, tag = 'input window, operand 0']
    #allocation5 [shape = 's32[2]{0}', space=sflag, size = 0x8, scoped, tag = 'scoped memory for conbr_block_forward.1']
    #allocation6 [shape = 's32[2]{0}', space=sflag, size = 0x8, scoped, tag = 'scoped memory for conbr_block_forward.1']
    #allocation7 [shape = 'u8[4096]{0}', space=vmem, size = 0x1000, scoped, tag = 'input window, operand 1, single buffered']
    #allocation8 [shape = 's32[1]{0}', space=sflag, size = 0x4, scoped, tag = 'scoped memory for conbr_block_forward.1']
    #allocation9 [shape = 'u8[8192]{0}', space=vmem, size = 0x2000, scoped, tag = 'output window, operand 0']
    %7 = vsyncpa [#allocation5], 0
    %s8 = scalar_lea.sflag [#allocation5], 1
    %9 = vsyncpa %s8, 0
    %10 = vsyncpa [#allocation8], 0
    %11 = vsyncpa [#allocation6], 0
    %s12 = scalar_lea.sflag [#allocation6], 1
    %13 = vsyncpa %s12, 0
    loop: start=0, step=1, limit=4
    $region2: #{conbr_block_forward.1} parent=1 // loop_pre_header
      _
    $region3: #{conbr_block_forward.1} parent=1 // loop_header
      %s15 = sphi 0, %s19
      %p16 = scmp.ge.s32.totalorder %s15, 4
      %s25 = sphi 0, %s27
      %s28 = sphi 0, %s25
      %s29 = sphi 0, %s28
      %s45 = sphi 0, %s29
      %s49 = sphi 0, %s49
      %s51 = sphi 0, %s49
      %s52 = sphi 0, %s51
      %s66 = sphi 0, %s52
      %s72 = sphi 0, %s74
      %s75 = sphi 0, %s72
      %s76 = sphi 0, %s75
      %s92 = sphi 0, %s76
    $region4: #{conbr_block_forward.1} parent=1 // loop_header_branch
      %18 = sbr.rel (%p16) target = $region8
    $region5: #{conbr_block_forward.1} parent=1 // loop_body
      %s20 = ssub.s32 %s15, 1
      %s21 = ssub.s32 %s15, 2
      %s22 = sadd.s32 %s15, 1
      %s23 = ssub.s32 %s15, %s22
      %p24 = scmp.eq.s32.totalorder %s23, 0
      %s26 = sadd.s32 %s25, 1
      %s27 = scalar_select %p24, %s25, %s26
      %p30 = pneg %p24
      %p31 = scmp.eq.s32.totalorder %s15, 1
      %p32 = por %p30, %p31
      %p33 = scmp.ne.s32.totalorder %s25, %s28
      %p34 = scmp.eq.s32.totalorder %s15, 0
      %p35 = por %p33, %p34
      %p36 = scmp.ne.s32.totalorder %s25, %s28
      %p37 = scmp.eq.s32.totalorder %s20, 1
      %p38 = por %p36, %p37
      %p39 = scmp.ne.s32.totalorder %s28, %s29
      %p40 = scmp.eq.s32.totalorder %s20, 0
      %p41 = por %p39, %p40
      %p42 = scmp.ne.s32.totalorder %s28, %s29
      %p43 = scmp.eq.s32.totalorder %s21, 1
      %p44 = por %p42, %p43
      %p46 = scmp.ne.s32.totalorder %s29, %s45
      %p47 = scmp.eq.s32.totalorder %s21, 0
      %p48 = por %p46, %p47
      %s50 = sadd.s32 %s49, 1
      %p53 = scmp.eq.s32.totalorder %s15, 1
      %p54 = scmp.ne.s32.totalorder %s49, %s51
      %p55 = scmp.eq.s32.totalorder %s15, 0
      %p56 = por %p54, %p55
      %p57 = scmp.ne.s32.totalorder %s49, %s51
      %p58 = scmp.eq.s32.totalorder %s20, 1
      %p59 = por %p57, %p58
      %p60 = scmp.ne.s32.totalorder %s51, %s52
      %p61 = scmp.eq.s32.totalorder %s20, 0
      %p62 = por %p60, %p61
      %p63 = scmp.ne.s32.totalorder %s51, %s52
      %p64 = scmp.eq.s32.totalorder %s21, 1
      %p65 = por %p63, %p64
      %p67 = scmp.ne.s32.totalorder %s52, %s66
      %p68 = scmp.eq.s32.totalorder %s21, 0
      %p69 = por %p67, %p68
      %s70 = ssub.s32 %s15, %s22
      %p71 = scmp.eq.s32.totalorder %s70, 0
      %s73 = sadd.s32 %s72, 1
      %s74 = scalar_select %p71, %s72, %s73
      %p77 = pneg %p71
      %p78 = scmp.eq.s32.totalorder %s15, 1
      %p79 = por %p77, %p78
      %p80 = scmp.ne.s32.totalorder %s72, %s75
      %p81 = scmp.eq.s32.totalorder %s15, 0
      %p82 = por %p80, %p81
      %p83 = scmp.ne.s32.totalorder %s72, %s75
      %p84 = scmp.eq.s32.totalorder %s20, 1
      %p85 = por %p83, %p84
      %p86 = scmp.ne.s32.totalorder %s75, %s76
      %p87 = scmp.eq.s32.totalorder %s20, 0
      %p88 = por %p86, %p87
      %p89 = scmp.ne.s32.totalorder %s75, %s76
      %p90 = scmp.eq.s32.totalorder %s21, 1
      %p91 = por %p89, %p90
      %p93 = scmp.ne.s32.totalorder %s76, %s92
      %p94 = scmp.eq.s32.totalorder %s21, 0
      %p95 = por %p93, %p94
      %p96 = scmp.le.s32.totalorder 1, %s15
      %p97 = scmp.lt.s32.totalorder %s15, 3
      %p98 = pnand %p96, %p97
      %p99 = pneg %p98
      // Predicated region
      $region9: #{conbr_block_forward.1} parent=5 // pred_check
        _
      $region10: #{conbr_block_forward.1} parent=5 // pred_check_branch
        %101 = sbr.rel (%p98) target = $region12
      $region11: #{conbr_block_forward.1} parent=5 // pred_region
        %s102 = ssub.s32 %s15, 1
        // Predicated region
        $region13: #{conbr_block_forward.1} parent=11 // pred_check
          %p103 = pneg %p62
        $region14: #{conbr_block_forward.1} parent=11 // pred_check_branch
          %105 = sbr.rel (%p103) target = $region16
        $region15: #{conbr_block_forward.1} parent=11 // pred_region
          %s107 = ssub.s32 128, 128
          %108 = vsyncadd [#allocation8], %s107
          %s110 = sshll.u32 [#allocation7], 4
          %s111 = int_to_ptr.vmem [resolvable:$true] %s110
          %113 = dma.hbm_to_vmem [thread:$0]  %s1, 128, %s111, [#allocation8]
        $region16: #{conbr_block_forward.1} parent=11 // pred_fallthru
          _
      $region12: #{conbr_block_forward.1} parent=5 // pred_fallthru
        _
      %p114 = scmp.lt.s32.totalorder %s15, 2
      // Predicated region
      $region17: #{conbr_block_forward.1} parent=5 // pred_check
        %p115 = pneg %p114
      $region18: #{conbr_block_forward.1} parent=5 // pred_check_branch
        %117 = sbr.rel (%p115) target = $region20
      $region19: #{conbr_block_forward.1} parent=5 // pred_region
        // Predicated region
        $region21: #{conbr_block_forward.1} parent=19 // pred_check
          %p118 = pneg %p35
        $region22: #{conbr_block_forward.1} parent=19 // pred_check_branch
          %120 = sbr.rel (%p118) target = $region24
        $region23: #{conbr_block_forward.1} parent=19 // pred_region
          %s121 = sand.u32 %s25, 1
          %s122 = scalar_lea.sflag [#allocation5], %s121
          %s123 = sand.u32 %s25, 1
          %s124 = smul.addr %s123, 4
          %s125 = scalar_lea.vmem [#allocation4], %s124
          %s127 = ssub.s32 64, 64
          %128 = vsyncadd %s122, %s127
          %s129 = smul.addr %s15, 64
          %s130 = scalar_lea.hbm %s0, %s129
          %s132 = sshll.u32 %s125, 4
          %s133 = int_to_ptr.vmem [resolvable:$true] %s132
          %135 = dma.hbm_to_vmem [thread:$0]  %s130, 64, %s133, %s122
        $region24: #{conbr_block_forward.1} parent=19 // pred_fallthru
          _
      $region20: #{conbr_block_forward.1} parent=5 // pred_fallthru
        _
      %p136 = scmp.le.s32.totalorder 1, %s15
      %p137 = scmp.lt.s32.totalorder %s15, 3
      %p138 = pnand %p136, %p137
      %p139 = pneg %p138
      // Predicated region
      $region25: #{conbr_block_forward.1} parent=5 // pred_check
        _
      $region26: #{conbr_block_forward.1} parent=5 // pred_check_branch
        %141 = sbr.rel (%p138) target = $region28
      $region27: #{conbr_block_forward.1} parent=5 // pred_region
        %s142 = ssub.s32 %s15, 1
        %s143 = sand.u32 %s28, 1
        %s144 = scalar_lea.sflag [#allocation5], %s143
        %s145 = sand.u32 %s28, 1
        %s146 = smul.addr %s145, 4
        %s147 = scalar_lea.vmem [#allocation4], %s146
        // Predicated region
        $region29: #{conbr_block_forward.1} parent=27 // pred_check
          %p148 = pneg %p41
        $region30: #{conbr_block_forward.1} parent=27 // pred_check_branch
          %150 = sbr.rel (%p148) target = $region32
        $region31: #{conbr_block_forward.1} parent=27 // pred_region
          %151 = dma.done %s144, 64
        $region32: #{conbr_block_forward.1} parent=27 // pred_fallthru
          _
        // Predicated region
        $region33: #{conbr_block_forward.1} parent=27 // pred_check
          %p152 = pneg %p62
        $region34: #{conbr_block_forward.1} parent=27 // pred_check_branch
          %154 = sbr.rel (%p152) target = $region36
        $region35: #{conbr_block_forward.1} parent=27 // pred_region
          %155 = dma.done [#allocation8], 128
        $region36: #{conbr_block_forward.1} parent=27 // pred_fallthru
          _
        %s156 = sand.u32 %s28, 1
        %s157 = scalar_lea.sflag [#allocation5], %s156
        %s158 = sand.u32 %s28, 1
        %s159 = smul.addr %s158, 4
        %s160 = scalar_lea.vmem [#allocation4], %s159
        %p161 = pneg %p41
        %p162 = pneg %p38
        %p163 = pneg %p62
        %p164 = pneg %p59
        %p165 = pneg %p88
        %p166 = pneg %p85
        %s167 = sand.u32 %s75, 1
        %s168 = scalar_lea.sflag [#allocation6], %s167
        %s169 = sand.u32 %s75, 1
        %s170 = smul.addr %s169, 8
        %s171 = scalar_lea.vmem [#allocation9], %s170
        %vm172 = vcmask 19456
        %173 = vst.msk [vmem:[#allocation2] sm:$0xf] %vm172, 0.0
        %vm174 = vcmask 44056
        %175 = vst.msk [vmem:[#allocation2 + $0x4] sm:$0xf] %vm174, 0.0
        %176 = vst [vmem:[#allocation3 + $0x1c] sm:$0x1] 1.0
        %v177 = vld [vmem:[%s147] sm:$0xf]
        %179 = vrot.lane.b32.xlu0 %v177, 3
        %v180 = vpop.permute.xlu0 %179
        %v181 = vrot.slane %v180, 4
        %vm182 = vcmask 23552
        %v183 = vsel %vm182, %v181, %v180
        %vm185 = vcmask 1043480
        %vm186 = vcmask 23556
        %vm187 = vmor %vm186, %vm185
        %188 = vst.msk [vmem:[#allocation2] sm:$0xff] %vm187, %v183
        %v189 = vld [vmem:[#allocation7] sm:$0xff]
        %v190 = vld [vmem:[#allocation2] sm:$0xf]
        %191 = vst [vmem:[#allocation3] sm:$0xf] %v190
        %v192 = vld [vmem:[#allocation2] sm:$0xff]
        %v194 = vcombine.high %v192, %v192
        %195 = vrot.lane.b32.xlu0 %v192, 127
        %v196 = vpop.permute.xlu0 %195
        %197 = vrot.lane.b32.xlu0 %v194, 127
        %v198 = vpop.permute.xlu0 %197
        %vm199 = vcmask 1039360
        %v200 = vsel %vm199, %v196, %v198
        %202 = vst [vmem:[#allocation3 + $0x4] sm:$0xf] %v200
        %v203 = vld [vmem:[#allocation2] sm:$0xff]
        %v205 = vcombine.high %v203, %v203
        %206 = vrot.lane.b32.xlu0 %v203, 126
        %v207 = vpop.permute.xlu0 %206
        %208 = vrot.lane.b32.xlu0 %v205, 126
        %v209 = vpop.permute.xlu0 %208
        %vm210 = vcmask 1031168
        %v211 = vsel %vm210, %v207, %v209
        %213 = vst [vmem:[#allocation3 + $0x8] sm:$0xf] %v211
        %v214 = vld [vmem:[#allocation2] sm:$0xff]
        %v216 = vcombine.high %v214, %v214
        %217 = vrot.lane.b32.xlu0 %v214, 125
        %v218 = vpop.permute.xlu0 %217
        %219 = vrot.lane.b32.xlu0 %v216, 125
        %v220 = vpop.permute.xlu0 %219
        %vm221 = vcmask 1022976
        %v222 = vsel %vm221, %v218, %v220
        %224 = vst [vmem:[#allocation3 + $0xc] sm:$0xf] %v222
        %v225 = vld [vmem:[#allocation2] sm:$0xff]
        %v227 = vcombine.high %v225, %v225
        %228 = vrot.lane.b32.xlu0 %v225, 124
        %v229 = vpop.permute.xlu0 %228
        %230 = vrot.lane.b32.xlu0 %v227, 124
        %v231 = vpop.permute.xlu0 %230
        %vm232 = vcmask 1014784
        %v233 = vsel %vm232, %v229, %v231
        %235 = vst [vmem:[#allocation3 + $0x10] sm:$0xf] %v233
        %v236 = vld [vmem:[#allocation2] sm:$0xff]
        %v238 = vcombine.high %v236, %v236
        %239 = vrot.lane.b32.xlu0 %v236, 123
        %v240 = vpop.permute.xlu0 %239
        %241 = vrot.lane.b32.xlu0 %v238, 123
        %v242 = vpop.permute.xlu0 %241
        %vm243 = vcmask 1006592
        %v244 = vsel %vm243, %v240, %v242
        %246 = vst [vmem:[#allocation3 + $0x14] sm:$0xf] %v244
        %v247 = vld [vmem:[#allocation2] sm:$0xff]
        %v249 = vcombine.high %v247, %v247
        %250 = vrot.lane.b32.xlu0 %v247, 122
        %v251 = vpop.permute.xlu0 %250
        %252 = vrot.lane.b32.xlu0 %v249, 122
        %v253 = vpop.permute.xlu0 %252
        %vm254 = vcmask 998400
        %v255 = vsel %vm254, %v251, %v253
        %257 = vst [vmem:[#allocation3 + $0x18] sm:$0xf] %v255
        %v258 = vld [vmem:[#allocation3] sm:$0xff]
        %v259 = vld [vmem:[#allocation3 + $0x8] sm:$0xff]
        %v260 = vld [vmem:[#allocation3 + $0x10] sm:$0xff]
        %v261 = vld [vmem:[#allocation3 + $0x18] sm:$0x1f]
        %vm262 = vcmask 236544
        %v264 = vsel %vm262, %v189, 0
        %vm266 = vcmask 1044480
        %v268 = vsel %vm266, %v261, 0
        %270 = vmatprep.subr.mxu0 0.0
        %271 = vmatpush1.msra.mxu0 0.0
        %272 = vmatprep.subr.mxu0 0.0
        %273 = vmatpush1.msra.mxu0 0.0
        %274 = vmatprep.subr.mxu0 0.0
        %275 = vmatpush1.msra.mxu0 0.0
        %276 = vmatprep.subr.mxu0 0.0
        %277 = vmatpush1.msra.mxu0 0.0
        %278 = vmatprep.subr.mxu0 0.0
        %279 = vmatpush1.msra.mxu0 0.0
        %280 = vmatprep.subr.mxu0 0.0
        %281 = vmatpush1.msra.mxu0 0.0
        %282 = vmatprep.subr.mxu0 0.0
        %283 = vmatpush1.msra.mxu0 0.0
        %284 = vmatprep.subr.mxu0 0.0
        %285 = vmatpush1.msra.mxu0 0.0
        %286 = vmatprep.subr.mxu0 0.0
        %287 = vmatpush1.msra.mxu0 0.0
        %288 = vmatprep.subr.mxu0 0.0
        %289 = vmatpush1.msra.mxu0 0.0
        %290 = vmatprep.subr.mxu0 0.0
        %291 = vmatpush1.msra.mxu0 0.0
        %292 = vmatprep.subr.mxu0 0.0
        %293 = vmatpush1.msra.mxu0 0.0
        %294 = vmatprep.subr.mxu0 0.0
        %295 = vmatpush1.msra.mxu0 %v268
        %296 = vmatprep.subr.mxu0 0.0
        %297 = vmatpush1.msra.mxu0 %v260
        %298 = vmatprep.subr.mxu0 0.0
        %299 = vmatpush1.msra.mxu0 %v259
        %300 = vmatprep.subr.mxu0 0.0
        %301 = vmatpush1.msra.mxu0 %v258
        %302 = vmatprep.subr.mxu0 0.0
        %303 = vmatpush2.msra.mxu0 0.0
        %304 = vmatprep.subr.mxu0 0.0
        %305 = vmatpush2.msra.mxu0 0.0
        %306 = vmatprep.subr.mxu0 0.0
        %307 = vmatpush2.msra.mxu0 0.0
        %308 = vmatprep.subr.mxu0 0.0
        %309 = vmatpush2.msra.mxu0 0.0
        %310 = vmatprep.subr.mxu0 0.0
        %311 = vmatpush2.msra.mxu0 0.0
        %312 = vmatprep.subr.mxu0 0.0
        %313 = vmatpush2.msra.mxu0 0.0
        %314 = vmatprep.subr.mxu0 0.0
        %315 = vmatpush2.msra.mxu0 0.0
        %316 = vmatprep.subr.mxu0 0.0
        %317 = vmatpush2.msra.mxu0 0.0
        %318 = vmatprep.subr.mxu0 0.0
        %319 = vmatpush2.msra.mxu0 0.0
        %320 = vmatprep.subr.mxu0 0.0
        %321 = vmatpush2.msra.mxu0 0.0
        %322 = vmatprep.subr.mxu0 0.0
        %323 = vmatpush2.msra.mxu0 0.0
        %324 = vmatprep.subr.mxu0 0.0
        %325 = vmatpush2.msra.mxu0 0.0
        %326 = vmatprep.subr.mxu0 0.0
        %327 = vmatpush2.msra.mxu0 0.0
        %328 = vmatprep.subr.mxu0 0.0
        %329 = vmatpush2.msra.mxu0 0.0
        %330 = vmatprep.subr.mxu0 0.0
        %331 = vmatpush2.msra.mxu0 0.0
        %332 = vmatprep.subr.mxu0 0.0
        %333 = vmatpush2.msra.mxu0 0.0
        %334 = vmatprep.mubr.f32.mxu0 0.0
        %335 = vmatmul.mubr.f32.gmra.mxu0 %v264
        %v336 = vpop.f32.mrf.mxu0
        %v337 = vadd.f32 0.0, %v336
        %v338 = vpop.f32.mrf.mxu0
        %339 = vdwg.mxu0
        %v340 = vmax.f32 %v337, 0.0
        %341 = vst [vmem:[%s171] sm:$0xff] %v340
        %s342 = sand.u32 %s75, 1
        %s343 = scalar_lea.sflag [#allocation6], %s342
        %s344 = sand.u32 %s75, 1
        %s345 = smul.addr %s344, 8
        %s346 = scalar_lea.vmem [#allocation9], %s345
        // Predicated region
        $region37: #{conbr_block_forward.1} parent=27 // pred_check
          %p347 = pneg %p85
        $region38: #{conbr_block_forward.1} parent=27 // pred_check_branch
          %349 = sbr.rel (%p347) target = $region40
        $region39: #{conbr_block_forward.1} parent=27 // pred_region
          %s351 = ssub.s32 128, 128
          %352 = vsyncadd %s343, %s351
          %s353 = smul.addr %s20, 128
          %s354 = scalar_lea.hbm %s2, %s353
          %s356 = sshll.u32 %s346, 4
          %s357 = int_to_ptr.vmem [resolvable:$true] %s356
          %359 = dma.vmem_to_hbm [thread:$0]  %s357, 128, %s354, %s343
        $region40: #{conbr_block_forward.1} parent=27 // pred_fallthru
          _
      $region28: #{conbr_block_forward.1} parent=5 // pred_fallthru
        _
      %p360 = scmp.le.s32.totalorder 2, %s15
      // Predicated region
      $region41: #{conbr_block_forward.1} parent=5 // pred_check
        %p361 = pneg %p360
      $region42: #{conbr_block_forward.1} parent=5 // pred_check_branch
        %363 = sbr.rel (%p361) target = $region44
      $region43: #{conbr_block_forward.1} parent=5 // pred_region
        %s364 = ssub.s32 %s15, 2
        // Predicated region
        $region45: #{conbr_block_forward.1} parent=43 // pred_check
          %p365 = pneg %p91
        $region46: #{conbr_block_forward.1} parent=43 // pred_check_branch
          %367 = sbr.rel (%p365) target = $region48
        $region47: #{conbr_block_forward.1} parent=43 // pred_region
          %s368 = sand.u32 %s76, 1
          %s369 = scalar_lea.sflag [#allocation6], %s368
          %s370 = sand.u32 %s76, 1
          %s371 = smul.addr %s370, 8
          %s372 = scalar_lea.vmem [#allocation9], %s371
          %373 = dma.done %s369, 128
        $region48: #{conbr_block_forward.1} parent=43 // pred_fallthru
          _
      $region44: #{conbr_block_forward.1} parent=5 // pred_fallthru
        _
    $region6: #{conbr_block_forward.1} parent=1 // loop_footer
      %s19 = sadd.s32 1, %s15
    $region7: #{conbr_block_forward.1} parent=1 // loop_footer_branch
      %14 = sbr.rel target = $region3
    $region8: #{conbr_block_forward.1} parent=1 // loop_exit
      _
    %374 = vsyncpa [#allocation5], 1
    %s375 = scalar_lea.sflag [#allocation5], 1
    %376 = vsyncpa %s375, 1
    %377 = vsyncpa [#allocation8], 1
    %378 = vsyncpa [#allocation6], 1
    %s379 = scalar_lea.sflag [#allocation6], 1
    %380 = vsyncpa %s379, 1

</llo_original>
